<compile_context>
chip_gen: v6e
topology: v6e:2x2x1
jax: 0.10.0
libtpu: 0.0.40
codegen_flags: <defaults>
</compile_context>

<pallas_src>
import functools

import jax
import jax.numpy as jnp
from jax.experimental import pallas as pl
from jax.experimental.pallas import tpu as pltpu

BN_EPS = 1e-5
LANE = 128


def _round_up(x, m):
    return (x + m - 1) // m * m


def _vmem_limit_bytes():
    """Generation-aware VMEM budget (3/4 of physical), with a safe fallback."""
    try:
        cap = int(pltpu.get_tpu_info().vmem_capacity_bytes)
    except Exception:
        cap = 64 * 1024 * 1024  # conservative: valid on v5e/v6e/v7x
    return cap * 3 // 4


# ---------------------------------------------------------------------------
# Fused kernel: BN stats + normalize + 3 x (Linear + ReLU), single grid step.
# ---------------------------------------------------------------------------
def subnet_fused_kernel(x_ref, gamma_ref, beta_ref,
                        w1_ref, b1_ref, w2_ref, b2_ref, w3_ref, b3_ref,
                        o_ref, *, n_rows):
    # ---- BatchNorm1d statistics over the VMEM-resident batch (f32) ---------
    x = x_ref[...].astype(jnp.float32)                      # (B, in_size)
    inv_n = 1.0 / float(n_rows)
    mean = jnp.sum(x, axis=0, keepdims=True) * inv_n
    centered = x - mean
    var = jnp.sum(centered * centered, axis=0, keepdims=True) * inv_n  # biased
    inv_std = jax.lax.rsqrt(var + BN_EPS)

    # Fold the affine transform into one scale/shift FMA on the hot path.
    scale = gamma_ref[...] * inv_std
    shift = beta_ref[...] - mean * scale
    normed = x * scale + shift

    # Dropout: identity (eval behaviour).

    # ---- 3 x (Linear + ReLU): bf16 MXU inputs, f32 accumulation ------------
    y1 = jnp.maximum(
        jnp.dot(normed.astype(jnp.bfloat16), w1_ref[...],
                preferred_element_type=jnp.float32) + b1_ref[...], 0.0)
    y2 = jnp.maximum(
        jnp.dot(y1.astype(jnp.bfloat16), w2_ref[...],
                preferred_element_type=jnp.float32) + b2_ref[...], 0.0)
    y3 = jnp.maximum(
        jnp.dot(y2.astype(jnp.bfloat16), w3_ref[...],
                preferred_element_type=jnp.float32) + b3_ref[...], 0.0)

    o_ref[...] = y3.astype(o_ref.dtype)


def subnet_forward(x, kparams, in_size, hidden_size):
    """x: (B, in_size) float32. kparams: padded kernel params (see pad_params)."""
    b = x.shape[0]
    assert x.shape[1] == in_size
    h_pad = kparams["w1"].shape[1]

    # Everything (x, weights, output, intermediates) must fit in VMEM for the
    # fused single-launch kernel. At the module's sizes this is < 1 MiB.
    resident_bytes = (b * in_size * 4 + b * h_pad * 4
                      + (in_size * h_pad + 2 * h_pad * h_pad) * 2
                      + (2 * in_size + 3 * h_pad) * 4)
    vmem_limit = _vmem_limit_bytes()
    assert resident_bytes * 4 < vmem_limit, "batch too large for fused kernel"

    flops = 2 * b * (in_size * h_pad + 2 * h_pad * h_pad) + 8 * b * in_size
    cost = pl.CostEstimate(flops=int(flops), transcendentals=int(in_size),
                           bytes_accessed=int(resident_bytes))

    kernel = functools.partial(subnet_fused_kernel, n_rows=b)

    out_pad = pl.pallas_call(
        kernel,
        out_shape=jax.ShapeDtypeStruct((b, h_pad), jnp.float32),
        grid=(1,),
        in_specs=[
            pl.BlockSpec((b, in_size), lambda i: (0, 0)),      # x (unpadded)
            pl.BlockSpec((1, in_size), lambda i: (0, 0)),      # gamma
            pl.BlockSpec((1, in_size), lambda i: (0, 0)),      # beta
            pl.BlockSpec((in_size, h_pad), lambda i: (0, 0)),  # w1 (bf16)
            pl.BlockSpec((1, h_pad), lambda i: (0, 0)),        # b1
            pl.BlockSpec((h_pad, h_pad), lambda i: (0, 0)),    # w2 (bf16)
            pl.BlockSpec((1, h_pad), lambda i: (0, 0)),        # b2
            pl.BlockSpec((h_pad, h_pad), lambda i: (0, 0)),    # w3 (bf16)
            pl.BlockSpec((1, h_pad), lambda i: (0, 0)),        # b3
        ],
        out_specs=pl.BlockSpec((b, h_pad), lambda i: (0, 0)),
        compiler_params=pltpu.CompilerParams(
            dimension_semantics=("arbitrary",),
            vmem_limit_bytes=vmem_limit),
        cost_estimate=cost,
    )(x.astype(jnp.float32),
      kparams["gamma"], kparams["beta"],
      kparams["w1"], kparams["b1"],
      kparams["w2"], kparams["b2"],
      kparams["w3"], kparams["b3"])

    # Slice back to the logical hidden width (padded lanes are exactly zero).
    return out_pad[:, :hidden_size]


# ---------------------------------------------------------------------------
# Parameter construction (logical, unpadded, f32) and host-side padding.
# ---------------------------------------------------------------------------
def init_params(key, in_size, hidden_size):
    """Xavier-uniform-style init matching nn.Linear shapes.

    PyTorch nn.Linear weight is (out, in); we store the transpose (in, out)
    so kernels compute x @ W directly.
    """
    k1, k2, k3, k4, k5, k6 = jax.random.split(key, 6)

    def linear(kw, kb, fan_in, fan_out):
        bound_w = jnp.sqrt(6.0 / (fan_in + fan_out))
        w_t = jax.random.uniform(kw, (fan_in, fan_out), jnp.float32,
                                 -bound_w, bound_w)
        bound_b = 1.0 / jnp.sqrt(fan_in)
        bias = jax.random.uniform(kb, (1, fan_out), jnp.float32,
                                  -bound_b, bound_b)
        return w_t, bias

    w1, b1 = linear(k1, k2, in_size, hidden_size)
    w2, b2 = linear(k3, k4, hidden_size, hidden_size)
    w3, b3 = linear(k5, k6, hidden_size, hidden_size)

    return {
        "gamma": jnp.ones((1, in_size), jnp.float32),   # BatchNorm1d weight
        "beta": jnp.zeros((1, in_size), jnp.float32),   # BatchNorm1d bias
        "w1": w1, "b1": b1,
        "w2": w2, "b2": b2,
        "w3": w3, "b3": b3,
    }


def pad_params(p, in_size, hidden_size):
    """Zero-pad only the hidden (output) dims to 128 lanes; weights -> bf16."""
    h_pad = _round_up(hidden_size, LANE)

    def pad2(a, rows, cols):
        return jnp.pad(a, ((0, rows - a.shape[0]), (0, cols - a.shape[1])))

    return {
        "gamma": p["gamma"],                                   # (1, in_size)
        "beta": p["beta"],                                     # (1, in_size)
        "w1": pad2(p["w1"], in_size, h_pad).astype(jnp.bfloat16),
        "b1": pad2(p["b1"], 1, h_pad),
        "w2": pad2(p["w2"], h_pad, h_pad).astype(jnp.bfloat16),
        "b2": pad2(p["b2"], 1, h_pad),
        "w3": pad2(p["w3"], h_pad, h_pad).astype(jnp.bfloat16),
        "b3": pad2(p["b3"], 1, h_pad),
    }


# ---------------------------------------------------------------------------
# Pure-JAX references for correctness checking.
# ---------------------------------------------------------------------------
def subnet_reference_f32(x, p):
    mean = jnp.mean(x, axis=0, keepdims=True)
    var = jnp.mean((x - mean) ** 2, axis=0, keepdims=True)
    normed = (x - mean) * jax.lax.rsqrt(var + BN_EPS) * p["gamma"] + p["beta"]
    y1 = jax.nn.relu(normed @ p["w1"] + p["b1"])
    y2 = jax.nn.relu(y1 @ p["w2"] + p["b2"])
    y3 = jax.nn.relu(y2 @ p["w3"] + p["b3"])
    return y3


def subnet_reference_bf16_path(x, p):
    """Same dtype path as the kernel: f32 BN, bf16 matmul inputs, f32 accum."""
    mean = jnp.mean(x, axis=0, keepdims=True)
    var = jnp.mean((x - mean) ** 2, axis=0, keepdims=True)
    normed = (x - mean) * jax.lax.rsqrt(var + BN_EPS) * p["gamma"] + p["beta"]

    def layer(h, w, bias):
        return jax.nn.relu(
            jnp.dot(h.astype(jnp.bfloat16), w.astype(jnp.bfloat16),
                    preferred_element_type=jnp.float32) + bias)

    y1 = layer(normed, p["w1"], p["b1"])
    y2 = layer(y1, p["w2"], p["b2"])
    y3 = layer(y2, p["w3"], p["b3"])
    return y3


if __name__ == "__main__":
    key = jax.random.PRNGKey(0)
    k_x, k_p = jax.random.split(key)

    batch, in_size, hidden_size = 256, 16, 32
    x = jax.random.normal(k_x, (batch, in_size), jnp.float32)
    params = init_params(k_p, in_size, hidden_size)
    kparams = pad_params(params, in_size, hidden_size)

    out = subnet_forward(x, kparams, in_size, hidden_size)
    out = jax.block_until_ready(out)
    assert out.shape == (batch, hidden_size)

    # Tight check against a reference that follows the same dtype path.
    ref_bf16 = subnet_reference_bf16_path(x, params)
    assert jnp.allclose(out, ref_bf16, atol=1e-2, rtol=1e-2), \
        "mismatch vs bf16-path reference"

    # Looser check of module semantics against the full-f32 reference.
    ref_f32 = subnet_reference_f32(x, params)
    assert jnp.allclose(out, ref_f32, atol=5e-2, rtol=5e-2), \
        "mismatch vs f32 reference"

    print("KERNEL_OK")
</pallas_src>

<mosaic_0001>
module attributes {stable_mosaic.version = 11 : i64} {
  func.func @subnet_fused_kernel(%arg0: i32, %arg1: memref<256x16xf32, #tpu.memory_space<vmem>>, %arg2: memref<1x16xf32, #tpu.memory_space<vmem>>, %arg3: memref<1x16xf32, #tpu.memory_space<vmem>>, %arg4: memref<16x128xbf16, #tpu.memory_space<vmem>>, %arg5: memref<1x128xf32, #tpu.memory_space<vmem>>, %arg6: memref<128x128xbf16, #tpu.memory_space<vmem>>, %arg7: memref<1x128xf32, #tpu.memory_space<vmem>>, %arg8: memref<128x128xbf16, #tpu.memory_space<vmem>>, %arg9: memref<1x128xf32, #tpu.memory_space<vmem>>, %arg10: memref<256x128xf32, #tpu.memory_space<vmem>>) attributes {dimension_semantics = [#tpu.dimension_semantics<arbitrary>], iteration_bounds = array<i64: 1>, scalar_prefetch = 0 : i64, scratch_operands = 0 : i64, tpu.core_type = #tpu.core_type<tc>, window_params = [{pipeline_mode = #tpu.pipeline_mode<synchronous>, transform_indices = @transform_0, window_bounds = array<i64: 256, 16>}, {pipeline_mode = #tpu.pipeline_mode<synchronous>, transform_indices = @transform_1, window_bounds = array<i64: 1, 16>}, {pipeline_mode = #tpu.pipeline_mode<synchronous>, transform_indices = @transform_2, window_bounds = array<i64: 1, 16>}, {pipeline_mode = #tpu.pipeline_mode<synchronous>, transform_indices = @transform_3, window_bounds = array<i64: 16, 128>}, {pipeline_mode = #tpu.pipeline_mode<synchronous>, transform_indices = @transform_4, window_bounds = array<i64: 1, 128>}, {pipeline_mode = #tpu.pipeline_mode<synchronous>, transform_indices = @transform_5, window_bounds = array<i64: 128, 128>}, {pipeline_mode = #tpu.pipeline_mode<synchronous>, transform_indices = @transform_6, window_bounds = array<i64: 1, 128>}, {pipeline_mode = #tpu.pipeline_mode<synchronous>, transform_indices = @transform_7, window_bounds = array<i64: 128, 128>}, {pipeline_mode = #tpu.pipeline_mode<synchronous>, transform_indices = @transform_8, window_bounds = array<i64: 1, 128>}, {pipeline_mode = #tpu.pipeline_mode<synchronous>, transform_indices = @transform_9, window_bounds = array<i64: 256, 128>}]} {
    %c0 = arith.constant 0 : index
    %c0_0 = arith.constant 0 : index
    %0 = vector.load %arg1[%c0, %c0_0] : memref<256x16xf32, #tpu.memory_space<vmem>>, vector<256x16xf32>
    %cst = arith.constant dense<0.000000e+00> : vector<16xf32>
    %1 = vector.multi_reduction <add>, %0, %cst [0] : vector<256x16xf32> to vector<16xf32>
    %2 = vector.shape_cast %1 : vector<16xf32> to vector<1x16xf32>
    %cst_1 = arith.constant 3.906250e-03 : f32
    %3 = vector.broadcast %cst_1 : f32 to vector<1x16xf32>
    %4 = arith.mulf %2, %3 : vector<1x16xf32>
    %5 = vector.broadcast %4 : vector<1x16xf32> to vector<256x16xf32>
    %6 = arith.subf %0, %5 : vector<256x16xf32>
    %7 = arith.mulf %6, %6 : vector<256x16xf32>
    %cst_2 = arith.constant dense<0.000000e+00> : vector<16xf32>
    %8 = vector.multi_reduction <add>, %7, %cst_2 [0] : vector<256x16xf32> to vector<16xf32>
    %9 = vector.shape_cast %8 : vector<16xf32> to vector<1x16xf32>
    %cst_3 = arith.constant 3.906250e-03 : f32
    %10 = vector.broadcast %cst_3 : f32 to vector<1x16xf32>
    %11 = arith.mulf %9, %10 : vector<1x16xf32>
    %cst_4 = arith.constant 9.99999974E-6 : f32
    %12 = vector.broadcast %cst_4 : f32 to vector<1x16xf32>
    %13 = arith.addf %11, %12 : vector<1x16xf32>
    %14 = math.rsqrt %13 : vector<1x16xf32>
    %c0_5 = arith.constant 0 : index
    %c0_6 = arith.constant 0 : index
    %15 = vector.load %arg2[%c0_5, %c0_6] : memref<1x16xf32, #tpu.memory_space<vmem>>, vector<1x16xf32>
    %16 = arith.mulf %15, %14 : vector<1x16xf32>
    %c0_7 = arith.constant 0 : index
    %c0_8 = arith.constant 0 : index
    %17 = vector.load %arg3[%c0_7, %c0_8] : memref<1x16xf32, #tpu.memory_space<vmem>>, vector<1x16xf32>
    %18 = arith.mulf %4, %16 : vector<1x16xf32>
    %19 = arith.subf %17, %18 : vector<1x16xf32>
    %20 = vector.broadcast %16 : vector<1x16xf32> to vector<256x16xf32>
    %21 = arith.mulf %0, %20 : vector<256x16xf32>
    %22 = vector.broadcast %19 : vector<1x16xf32> to vector<256x16xf32>
    %23 = arith.addf %21, %22 : vector<256x16xf32>
    %24 = arith.truncf %23 : vector<256x16xf32> to vector<256x16xbf16>
    %c0_9 = arith.constant 0 : index
    %c0_10 = arith.constant 0 : index
    %25 = vector.load %arg4[%c0_9, %c0_10] : memref<16x128xbf16, #tpu.memory_space<vmem>>, vector<16x128xbf16>
    %cst_11 = arith.constant dense<0.000000e+00> : vector<256x128xf32>
    %26 = tpu.matmul %24, %25, %cst_11 {dimension_numbers = #tpu.dot_dimension_numbers<[1], [0], [0], [1], [0, 0, 1, 1], [], []>} : vector<256x16xbf16>, vector<16x128xbf16>, vector<256x128xf32> -> vector<256x128xf32>
    %c0_12 = arith.constant 0 : index
    %c0_13 = arith.constant 0 : index
    %27 = vector.load %arg5[%c0_12, %c0_13] : memref<1x128xf32, #tpu.memory_space<vmem>>, vector<1x128xf32>
    %28 = vector.broadcast %27 : vector<1x128xf32> to vector<256x128xf32>
    %29 = arith.addf %26, %28 : vector<256x128xf32>
    %cst_14 = arith.constant 0.000000e+00 : f32
    %30 = vector.broadcast %cst_14 : f32 to vector<256x128xf32>
    %31 = arith.maximumf %29, %30 : vector<256x128xf32>
    %32 = arith.truncf %31 : vector<256x128xf32> to vector<256x128xbf16>
    %c0_15 = arith.constant 0 : index
    %c0_16 = arith.constant 0 : index
    %33 = vector.load %arg6[%c0_15, %c0_16] : memref<128x128xbf16, #tpu.memory_space<vmem>>, vector<128x128xbf16>
    %cst_17 = arith.constant dense<0.000000e+00> : vector<256x128xf32>
    %34 = tpu.matmul %32, %33, %cst_17 {dimension_numbers = #tpu.dot_dimension_numbers<[1], [0], [0], [1], [0, 0, 1, 1], [], []>} : vector<256x128xbf16>, vector<128x128xbf16>, vector<256x128xf32> -> vector<256x128xf32>
    %c0_18 = arith.constant 0 : index
    %c0_19 = arith.constant 0 : index
    %35 = vector.load %arg7[%c0_18, %c0_19] : memref<1x128xf32, #tpu.memory_space<vmem>>, vector<1x128xf32>
    %36 = vector.broadcast %35 : vector<1x128xf32> to vector<256x128xf32>
    %37 = arith.addf %34, %36 : vector<256x128xf32>
    %cst_20 = arith.constant 0.000000e+00 : f32
    %38 = vector.broadcast %cst_20 : f32 to vector<256x128xf32>
    %39 = arith.maximumf %37, %38 : vector<256x128xf32>
    %40 = arith.truncf %39 : vector<256x128xf32> to vector<256x128xbf16>
    %c0_21 = arith.constant 0 : index
    %c0_22 = arith.constant 0 : index
    %41 = vector.load %arg8[%c0_21, %c0_22] : memref<128x128xbf16, #tpu.memory_space<vmem>>, vector<128x128xbf16>
    %cst_23 = arith.constant dense<0.000000e+00> : vector<256x128xf32>
    %42 = tpu.matmul %40, %41, %cst_23 {dimension_numbers = #tpu.dot_dimension_numbers<[1], [0], [0], [1], [0, 0, 1, 1], [], []>} : vector<256x128xbf16>, vector<128x128xbf16>, vector<256x128xf32> -> vector<256x128xf32>
    %c0_24 = arith.constant 0 : index
    %c0_25 = arith.constant 0 : index
    %43 = vector.load %arg9[%c0_24, %c0_25] : memref<1x128xf32, #tpu.memory_space<vmem>>, vector<1x128xf32>
    %44 = vector.broadcast %43 : vector<1x128xf32> to vector<256x128xf32>
    %45 = arith.addf %42, %44 : vector<256x128xf32>
    %cst_26 = arith.constant 0.000000e+00 : f32
    %46 = vector.broadcast %cst_26 : f32 to vector<256x128xf32>
    %47 = arith.maximumf %45, %46 : vector<256x128xf32>
    %c0_27 = arith.constant 0 : index
    %c0_28 = arith.constant 0 : index
    %48 = vector.load %arg10[%c0_27, %c0_28] : memref<256x128xf32, #tpu.memory_space<vmem>>, vector<256x128xf32>
    tpu.vector_store %arg10[%c0_27, %c0_28], %47 {strides = array<i32>} : memref<256x128xf32, #tpu.memory_space<vmem>>, vector<256x128xf32>,
    return
  }
  func.func @transform_0(%arg0: i32) -> (i32, i32) {
    %c0_i32 = arith.constant 0 : i32
    %c0_i32_0 = arith.constant 0 : i32
    %c0_i32_1 = arith.constant 0 : i32
    return %c0_i32, %c0_i32_0 : i32, i32
  }
  func.func @transform_1(%arg0: i32) -> (i32, i32) {
    %c0_i32 = arith.constant 0 : i32
    %c0_i32_0 = arith.constant 0 : i32
    %c0_i32_1 = arith.constant 0 : i32
    return %c0_i32, %c0_i32_0 : i32, i32
  }
  func.func @transform_2(%arg0: i32) -> (i32, i32) {
    %c0_i32 = arith.constant 0 : i32
    %c0_i32_0 = arith.constant 0 : i32
    %c0_i32_1 = arith.constant 0 : i32
    return %c0_i32, %c0_i32_0 : i32, i32
  }
  func.func @transform_3(%arg0: i32) -> (i32, i32) {
    %c0_i32 = arith.constant 0 : i32
    %c0_i32_0 = arith.constant 0 : i32
    %c0_i32_1 = arith.constant 0 : i32
    return %c0_i32, %c0_i32_0 : i32, i32
  }
  func.func @transform_4(%arg0: i32) -> (i32, i32) {
    %c0_i32 = arith.constant 0 : i32
    %c0_i32_0 = arith.constant 0 : i32
    %c0_i32_1 = arith.constant 0 : i32
    return %c0_i32, %c0_i32_0 : i32, i32
  }
  func.func @transform_5(%arg0: i32) -> (i32, i32) {
    %c0_i32 = arith.constant 0 : i32
    %c0_i32_0 = arith.constant 0 : i32
    %c0_i32_1 = arith.constant 0 : i32
    return %c0_i32, %c0_i32_0 : i32, i32
  }
  func.func @transform_6(%arg0: i32) -> (i32, i32) {
    %c0_i32 = arith.constant 0 : i32
    %c0_i32_0 = arith.constant 0 : i32
    %c0_i32_1 = arith.constant 0 : i32
    return %c0_i32, %c0_i32_0 : i32, i32
  }
  func.func @transform_7(%arg0: i32) -> (i32, i32) {
    %c0_i32 = arith.constant 0 : i32
    %c0_i32_0 = arith.constant 0 : i32
    %c0_i32_1 = arith.constant 0 : i32
    return %c0_i32, %c0_i32_0 : i32, i32
  }
  func.func @transform_8(%arg0: i32) -> (i32, i32) {
    %c0_i32 = arith.constant 0 : i32
    %c0_i32_0 = arith.constant 0 : i32
    %c0_i32_1 = arith.constant 0 : i32
    return %c0_i32, %c0_i32_0 : i32, i32
  }
  func.func @transform_9(%arg0: i32) -> (i32, i32) {
    %c0_i32 = arith.constant 0 : i32
    %c0_i32_0 = arith.constant 0 : i32
    %c0_i32_1 = arith.constant 0 : i32
    return %c0_i32, %c0_i32_0 : i32, i32
  }
}

</mosaic_0001>

<llo_original>
// kernel: tpu_custom_call.1
$region0: #{tpu_custom_call.1}
  #allocation0 [shape = 'u32[]', space=smem, size = 0x4, offset = 0x4, fixed_abs, tag = 'smem constant byte address 0x4 - core index']
  #allocation1 [shape = 'u32[144,128]{1,0:T(1,128)}', space=vmem, size = 0x12000, scoped, tag = 'internal scratch']
  %s0 = inlined_call_operand.vmem [shape: f32[256,16], index: 0, kind: input, shape index: {}]
  %s1 = inlined_call_operand.vmem [shape: f32[1,16], index: 1, kind: input, shape index: {}]
  %s2 = inlined_call_operand.vmem [shape: f32[1,16], index: 2, kind: input, shape index: {}]
  %s3 = inlined_call_operand.vmem [shape: bf16[16,128], index: 3, kind: input, shape index: {}]
  %s4 = inlined_call_operand.vmem [shape: f32[1,128], index: 4, kind: input, shape index: {}]
  %s5 = inlined_call_operand.vmem [shape: bf16[128,128], index: 5, kind: input, shape index: {}]
  %s6 = inlined_call_operand.vmem [shape: f32[1,128], index: 6, kind: input, shape index: {}]
  %s7 = inlined_call_operand.vmem [shape: bf16[128,128], index: 7, kind: input, shape index: {}]
  %s8 = inlined_call_operand.vmem [shape: f32[1,128], index: 8, kind: input, shape index: {}]
  %s9 = inlined_call_operand.hbm [shape: f32[256,128], index: 9, kind: output, shape index: {}]
  %s10 = sld [smem:[#allocation0]]
  $region46: #{tpu_custom_call.1} parent=0
    _
  %s12 = ssub.s32 1, %s10
  %s13 = scalar_select 0, %s12, %s10
  $region1: #{tpu_custom_call.1} parent=0
    #allocation2 [shape = 'u8[131072]{0}', space=vmem, size = 0x20000, scoped, tag = 'output window, operand 0, single buffered']
    #allocation3 [shape = 's32[1]{0}', space=sflag, size = 0x4, scoped, tag = 'scoped memory for tpu_custom_call.1']
    %14 = vsyncpa [#allocation3], 0
    // Predicated region
    $region2: #{tpu_custom_call.1} parent=1 // pred_check
      _
    $region3: #{tpu_custom_call.1} parent=1 // pred_check_branch
      %16 = sbr.rel (0) target = $region5
    $region4: #{tpu_custom_call.1} parent=1 // pred_region
      _
    $region5: #{tpu_custom_call.1} parent=1 // pred_fallthru
      _
    // Predicated region
    $region6: #{tpu_custom_call.1} parent=1 // pred_check
      _
    $region7: #{tpu_custom_call.1} parent=1 // pred_check_branch
      %18 = sbr.rel (0) target = $region9
    $region8: #{tpu_custom_call.1} parent=1 // pred_region
      _
    $region9: #{tpu_custom_call.1} parent=1 // pred_fallthru
      _
    // Predicated region
    $region10: #{tpu_custom_call.1} parent=1 // pred_check
      _
    $region11: #{tpu_custom_call.1} parent=1 // pred_check_branch
      %20 = sbr.rel (0) target = $region13
    $region12: #{tpu_custom_call.1} parent=1 // pred_region
      _
    $region13: #{tpu_custom_call.1} parent=1 // pred_fallthru
      _
    // Predicated region
    $region14: #{tpu_custom_call.1} parent=1 // pred_check
      _
    $region15: #{tpu_custom_call.1} parent=1 // pred_check_branch
      %22 = sbr.rel (0) target = $region17
    $region16: #{tpu_custom_call.1} parent=1 // pred_region
      _
    $region17: #{tpu_custom_call.1} parent=1 // pred_fallthru
      _
    // Predicated region
    $region18: #{tpu_custom_call.1} parent=1 // pred_check
      _
    $region19: #{tpu_custom_call.1} parent=1 // pred_check_branch
      %24 = sbr.rel (0) target = $region21
    $region20: #{tpu_custom_call.1} parent=1 // pred_region
      _
    $region21: #{tpu_custom_call.1} parent=1 // pred_fallthru
      _
    // Predicated region
    $region22: #{tpu_custom_call.1} parent=1 // pred_check
      _
    $region23: #{tpu_custom_call.1} parent=1 // pred_check_branch
      %26 = sbr.rel (0) target = $region25
    $region24: #{tpu_custom_call.1} parent=1 // pred_region
      _
    $region25: #{tpu_custom_call.1} parent=1 // pred_fallthru
      _
    // Predicated region
    $region26: #{tpu_custom_call.1} parent=1 // pred_check
      _
    $region27: #{tpu_custom_call.1} parent=1 // pred_check_branch
      %28 = sbr.rel (0) target = $region29
    $region28: #{tpu_custom_call.1} parent=1 // pred_region
      _
    $region29: #{tpu_custom_call.1} parent=1 // pred_fallthru
      _
    // Predicated region
    $region30: #{tpu_custom_call.1} parent=1 // pred_check
      _
    $region31: #{tpu_custom_call.1} parent=1 // pred_check_branch
      %30 = sbr.rel (0) target = $region33
    $region32: #{tpu_custom_call.1} parent=1 // pred_region
      _
    $region33: #{tpu_custom_call.1} parent=1 // pred_fallthru
      _
    // Predicated region
    $region34: #{tpu_custom_call.1} parent=1 // pred_check
      _
    $region35: #{tpu_custom_call.1} parent=1 // pred_check_branch
      %32 = sbr.rel (0) target = $region37
    $region36: #{tpu_custom_call.1} parent=1 // pred_region
      _
    $region37: #{tpu_custom_call.1} parent=1 // pred_fallthru
      _
    %v34 = vld [vmem:[%s0] sm:$0xff]
    %v35 = vld [vmem:[%s0 + $0x8] sm:$0xff]
    %v36 = vld [vmem:[%s0 + $0x10] sm:$0xff]
    %v37 = vld [vmem:[%s0 + $0x18] sm:$0xff]
    %v38 = vld [vmem:[%s0 + $0x20] sm:$0xff]
    %v39 = vld [vmem:[%s0 + $0x28] sm:$0xff]
    %v40 = vld [vmem:[%s0 + $0x30] sm:$0xff]
    %v41 = vld [vmem:[%s0 + $0x38] sm:$0xff]
    %v42 = vld [vmem:[%s0 + $0x40] sm:$0xff]
    %v43 = vld [vmem:[%s0 + $0x48] sm:$0xff]
    %v44 = vld [vmem:[%s0 + $0x50] sm:$0xff]
    %v45 = vld [vmem:[%s0 + $0x58] sm:$0xff]
    %v46 = vld [vmem:[%s0 + $0x60] sm:$0xff]
    %v47 = vld [vmem:[%s0 + $0x68] sm:$0xff]
    %v48 = vld [vmem:[%s0 + $0x70] sm:$0xff]
    %v49 = vld [vmem:[%s0 + $0x78] sm:$0xff]
    %v50 = vld [vmem:[%s0 + $0x80] sm:$0xff]
    %v51 = vld [vmem:[%s0 + $0x88] sm:$0xff]
    %v52 = vld [vmem:[%s0 + $0x90] sm:$0xff]
    %v53 = vld [vmem:[%s0 + $0x98] sm:$0xff]
    %v54 = vld [vmem:[%s0 + $0xa0] sm:$0xff]
    %v55 = vld [vmem:[%s0 + $0xa8] sm:$0xff]
    %v56 = vld [vmem:[%s0 + $0xb0] sm:$0xff]
    %v57 = vld [vmem:[%s0 + $0xb8] sm:$0xff]
    %v58 = vld [vmem:[%s0 + $0xc0] sm:$0xff]
    %v59 = vld [vmem:[%s0 + $0xc8] sm:$0xff]
    %v60 = vld [vmem:[%s0 + $0xd0] sm:$0xff]
    %v61 = vld [vmem:[%s0 + $0xd8] sm:$0xff]
    %v62 = vld [vmem:[%s0 + $0xe0] sm:$0xff]
    %v63 = vld [vmem:[%s0 + $0xe8] sm:$0xff]
    %v64 = vld [vmem:[%s0 + $0xf0] sm:$0xff]
    %v65 = vld [vmem:[%s0 + $0xf8] sm:$0xff]
    %vm66 = vcmask 130048
    %v67 = vsel %vm66, %v34, 0.0
    %v68 = vsel %vm66, %v35, 0.0
    %v69 = vadd.f32 %v67, %v68
    %v70 = vsel %vm66, %v36, 0.0
    %v71 = vadd.f32 %v69, %v70
    %v72 = vsel %vm66, %v37, 0.0
    %v73 = vadd.f32 %v71, %v72
    %v74 = vsel %vm66, %v38, 0.0
    %v75 = vadd.f32 %v73, %v74
    %v76 = vsel %vm66, %v39, 0.0
    %v77 = vadd.f32 %v75, %v76
    %v78 = vsel %vm66, %v40, 0.0
    %v79 = vadd.f32 %v77, %v78
    %v80 = vsel %vm66, %v41, 0.0
    %v81 = vadd.f32 %v79, %v80
    %v82 = vsel %vm66, %v42, 0.0
    %v83 = vadd.f32 %v81, %v82
    %v84 = vsel %vm66, %v43, 0.0
    %v85 = vadd.f32 %v83, %v84
    %v86 = vsel %vm66, %v44, 0.0
    %v87 = vadd.f32 %v85, %v86
    %v88 = vsel %vm66, %v45, 0.0
    %v89 = vadd.f32 %v87, %v88
    %v90 = vsel %vm66, %v46, 0.0
    %v91 = vadd.f32 %v89, %v90
    %v92 = vsel %vm66, %v47, 0.0
    %v93 = vadd.f32 %v91, %v92
    %v94 = vsel %vm66, %v48, 0.0
    %v95 = vadd.f32 %v93, %v94
    %v96 = vsel %vm66, %v49, 0.0
    %v97 = vadd.f32 %v95, %v96
    %v98 = vsel %vm66, %v50, 0.0
    %v99 = vadd.f32 %v97, %v98
    %v100 = vsel %vm66, %v51, 0.0
    %v101 = vadd.f32 %v99, %v100
    %v102 = vsel %vm66, %v52, 0.0
    %v103 = vadd.f32 %v101, %v102
    %v104 = vsel %vm66, %v53, 0.0
    %v105 = vadd.f32 %v103, %v104
    %v106 = vsel %vm66, %v54, 0.0
    %v107 = vadd.f32 %v105, %v106
    %v108 = vsel %vm66, %v55, 0.0
    %v109 = vadd.f32 %v107, %v108
    %v110 = vsel %vm66, %v56, 0.0
    %v111 = vadd.f32 %v109, %v110
    %v112 = vsel %vm66, %v57, 0.0
    %v113 = vadd.f32 %v111, %v112
    %v114 = vsel %vm66, %v58, 0.0
    %v115 = vadd.f32 %v113, %v114
    %v116 = vsel %vm66, %v59, 0.0
    %v117 = vadd.f32 %v115, %v116
    %v118 = vsel %vm66, %v60, 0.0
    %v119 = vadd.f32 %v117, %v118
    %v120 = vsel %vm66, %v61, 0.0
    %v121 = vadd.f32 %v119, %v120
    %v122 = vsel %vm66, %v62, 0.0
    %v123 = vadd.f32 %v121, %v122
    %v124 = vsel %vm66, %v63, 0.0
    %v125 = vadd.f32 %v123, %v124
    %v126 = vsel %vm66, %v64, 0.0
    %v127 = vadd.f32 %v125, %v126
    %v128 = vsel %vm66, %v65, 0.0
    %v129 = vadd.f32 %v127, %v128
    %v130 = vrot.slane %v129, 4
    %v131 = vadd.f32 %v129, %v130
    %v132 = vrot.slane %v131, 2
    %v133 = vadd.f32 %v131, %v132
    %v134 = vrot.slane %v133, 1
    %v135 = vadd.f32 %v133, %v134
    %v136 = vmul.f32 %v135, 0.00390625
    %v137 = vsub.f32 %v34, %v136
    %v138 = vsub.f32 %v35, %v136
    %v139 = vsub.f32 %v36, %v136
    %v140 = vsub.f32 %v37, %v136
    %v141 = vsub.f32 %v38, %v136
    %v142 = vsub.f32 %v39, %v136
    %v143 = vsub.f32 %v40, %v136
    %v144 = vsub.f32 %v41, %v136
    %v145 = vsub.f32 %v42, %v136
    %v146 = vsub.f32 %v43, %v136
    %v147 = vsub.f32 %v44, %v136
    %v148 = vsub.f32 %v45, %v136
    %v149 = vsub.f32 %v46, %v136
    %v150 = vsub.f32 %v47, %v136
    %v151 = vsub.f32 %v48, %v136
    %v152 = vsub.f32 %v49, %v136
    %v153 = vsub.f32 %v50, %v136
    %v154 = vsub.f32 %v51, %v136
    %v155 = vsub.f32 %v52, %v136
    %v156 = vsub.f32 %v53, %v136
    %v157 = vsub.f32 %v54, %v136
    %v158 = vsub.f32 %v55, %v136
    %v159 = vsub.f32 %v56, %v136
    %v160 = vsub.f32 %v57, %v136
    %v161 = vsub.f32 %v58, %v136
    %v162 = vsub.f32 %v59, %v136
    %v163 = vsub.f32 %v60, %v136
    %v164 = vsub.f32 %v61, %v136
    %v165 = vsub.f32 %v62, %v136
    %v166 = vsub.f32 %v63, %v136
    %v167 = vsub.f32 %v64, %v136
    %v168 = vsub.f32 %v65, %v136
    %v169 = vmul.f32 %v137, %v137
    %v170 = vmul.f32 %v138, %v138
    %v171 = vmul.f32 %v139, %v139
    %v172 = vmul.f32 %v140, %v140
    %v173 = vmul.f32 %v141, %v141
    %v174 = vmul.f32 %v142, %v142
    %v175 = vmul.f32 %v143, %v143
    %v176 = vmul.f32 %v144, %v144
    %v177 = vmul.f32 %v145, %v145
    %v178 = vmul.f32 %v146, %v146
    %v179 = vmul.f32 %v147, %v147
    %v180 = vmul.f32 %v148, %v148
    %v181 = vmul.f32 %v149, %v149
    %v182 = vmul.f32 %v150, %v150
    %v183 = vmul.f32 %v151, %v151
    %v184 = vmul.f32 %v152, %v152
    %v185 = vmul.f32 %v153, %v153
    %v186 = vmul.f32 %v154, %v154
    %v187 = vmul.f32 %v155, %v155
    %v188 = vmul.f32 %v156, %v156
    %v189 = vmul.f32 %v157, %v157
    %v190 = vmul.f32 %v158, %v158
    %v191 = vmul.f32 %v159, %v159
    %v192 = vmul.f32 %v160, %v160
    %v193 = vmul.f32 %v161, %v161
    %v194 = vmul.f32 %v162, %v162
    %v195 = vmul.f32 %v163, %v163
    %v196 = vmul.f32 %v164, %v164
    %v197 = vmul.f32 %v165, %v165
    %v198 = vmul.f32 %v166, %v166
    %v199 = vmul.f32 %v167, %v167
    %v200 = vmul.f32 %v168, %v168
    %v201 = vsel %vm66, %v169, 0.0
    %v202 = vsel %vm66, %v170, 0.0
    %v203 = vadd.f32 %v201, %v202
    %v204 = vsel %vm66, %v171, 0.0
    %v205 = vadd.f32 %v203, %v204
    %v206 = vsel %vm66, %v172, 0.0
    %v207 = vadd.f32 %v205, %v206
    %v208 = vsel %vm66, %v173, 0.0
    %v209 = vadd.f32 %v207, %v208
    %v210 = vsel %vm66, %v174, 0.0
    %v211 = vadd.f32 %v209, %v210
    %v212 = vsel %vm66, %v175, 0.0
    %v213 = vadd.f32 %v211, %v212
    %v214 = vsel %vm66, %v176, 0.0
    %v215 = vadd.f32 %v213, %v214
    %v216 = vsel %vm66, %v177, 0.0
    %v217 = vadd.f32 %v215, %v216
    %v218 = vsel %vm66, %v178, 0.0
    %v219 = vadd.f32 %v217, %v218
    %v220 = vsel %vm66, %v179, 0.0
    %v221 = vadd.f32 %v219, %v220
    %v222 = vsel %vm66, %v180, 0.0
    %v223 = vadd.f32 %v221, %v222
    %v224 = vsel %vm66, %v181, 0.0
    %v225 = vadd.f32 %v223, %v224
    %v226 = vsel %vm66, %v182, 0.0
    %v227 = vadd.f32 %v225, %v226
    %v228 = vsel %vm66, %v183, 0.0
    %v229 = vadd.f32 %v227, %v228
    %v230 = vsel %vm66, %v184, 0.0
    %v231 = vadd.f32 %v229, %v230
    %v232 = vsel %vm66, %v185, 0.0
    %v233 = vadd.f32 %v231, %v232
    %v234 = vsel %vm66, %v186, 0.0
    %v235 = vadd.f32 %v233, %v234
    %v236 = vsel %vm66, %v187, 0.0
    %v237 = vadd.f32 %v235, %v236
    %v238 = vsel %vm66, %v188, 0.0
    %v239 = vadd.f32 %v237, %v238
    %v240 = vsel %vm66, %v189, 0.0
    %v241 = vadd.f32 %v239, %v240
    %v242 = vsel %vm66, %v190, 0.0
    %v243 = vadd.f32 %v241, %v242
    %v244 = vsel %vm66, %v191, 0.0
    %v245 = vadd.f32 %v243, %v244
    %v246 = vsel %vm66, %v192, 0.0
    %v247 = vadd.f32 %v245, %v246
    %v248 = vsel %vm66, %v193, 0.0
    %v249 = vadd.f32 %v247, %v248
    %v250 = vsel %vm66, %v194, 0.0
    %v251 = vadd.f32 %v249, %v250
    %v252 = vsel %vm66, %v195, 0.0
    %v253 = vadd.f32 %v251, %v252
    %v254 = vsel %vm66, %v196, 0.0
    %v255 = vadd.f32 %v253, %v254
    %v256 = vsel %vm66, %v197, 0.0
    %v257 = vadd.f32 %v255, %v256
    %v258 = vsel %vm66, %v198, 0.0
    %v259 = vadd.f32 %v257, %v258
    %v260 = vsel %vm66, %v199, 0.0
    %v261 = vadd.f32 %v259, %v260
    %v262 = vsel %vm66, %v200, 0.0
    %v263 = vadd.f32 %v261, %v262
    %v264 = vrot.slane %v263, 4
    %v265 = vadd.f32 %v263, %v264
    %v266 = vrot.slane %v265, 2
    %v267 = vadd.f32 %v265, %v266
    %v268 = vrot.slane %v267, 1
    %v269 = vadd.f32 %v267, %v268
    %v270 = vmul.f32 %v269, 0.00390625
    %v271 = vadd.f32 %v270, 1e-05
    %v272 = vrsqrt.pop %v271
    %v273 = vld [vmem:[%s1] sm:$0x1]
    %v274 = vmul.f32 %v273, %v272
    %v275 = vld [vmem:[%s2] sm:$0x1]
    %v276 = vmul.f32 %v136, %v274
    %v277 = vsub.f32 %v275, %v276
    %v279 = vlaneseq
    %v280 = vshrl.u32 %v279, 7
    %v281 = vsub.s32 0, %v280
    %v282 = vrot.slane %v274, %v281
    %v284 = vmul.f32 %v34, %v282
    %v285 = vmul.f32 %v35, %v282
    %v286 = vmul.f32 %v36, %v282
    %v287 = vmul.f32 %v37, %v282
    %v288 = vmul.f32 %v38, %v282
    %v289 = vmul.f32 %v39, %v282
    %v290 = vmul.f32 %v40, %v282
    %v291 = vmul.f32 %v41, %v282
    %v292 = vmul.f32 %v42, %v282
    %v293 = vmul.f32 %v43, %v282
    %v294 = vmul.f32 %v44, %v282
    %v295 = vmul.f32 %v45, %v282
    %v296 = vmul.f32 %v46, %v282
    %v297 = vmul.f32 %v47, %v282
    %v298 = vmul.f32 %v48, %v282
    %v299 = vmul.f32 %v49, %v282
    %v300 = vmul.f32 %v50, %v282
    %v301 = vmul.f32 %v51, %v282
    %v302 = vmul.f32 %v52, %v282
    %v303 = vmul.f32 %v53, %v282
    %v304 = vmul.f32 %v54, %v282
    %v305 = vmul.f32 %v55, %v282
    %v306 = vmul.f32 %v56, %v282
    %v307 = vmul.f32 %v57, %v282
    %v308 = vmul.f32 %v58, %v282
    %v309 = vmul.f32 %v59, %v282
    %v310 = vmul.f32 %v60, %v282
    %v311 = vmul.f32 %v61, %v282
    %v312 = vmul.f32 %v62, %v282
    %v313 = vmul.f32 %v63, %v282
    %v314 = vmul.f32 %v64, %v282
    %v315 = vmul.f32 %v65, %v282
    %v317 = vlaneseq
    %v318 = vshrl.u32 %v317, 7
    %v319 = vsub.s32 0, %v318
    %v320 = vrot.slane %v277, %v319
    %v322 = vadd.f32 %v284, %v320
    %v323 = vadd.f32 %v285, %v320
    %v324 = vadd.f32 %v286, %v320
    %v325 = vadd.f32 %v287, %v320
    %v326 = vadd.f32 %v288, %v320
    %v327 = vadd.f32 %v289, %v320
    %v328 = vadd.f32 %v290, %v320
    %v329 = vadd.f32 %v291, %v320
    %v330 = vadd.f32 %v292, %v320
    %v331 = vadd.f32 %v293, %v320
    %v332 = vadd.f32 %v294, %v320
    %v333 = vadd.f32 %v295, %v320
    %v334 = vadd.f32 %v296, %v320
    %v335 = vadd.f32 %v297, %v320
    %v336 = vadd.f32 %v298, %v320
    %v337 = vadd.f32 %v299, %v320
    %v338 = vadd.f32 %v300, %v320
    %v339 = vadd.f32 %v301, %v320
    %v340 = vadd.f32 %v302, %v320
    %v341 = vadd.f32 %v303, %v320
    %v342 = vadd.f32 %v304, %v320
    %v343 = vadd.f32 %v305, %v320
    %v344 = vadd.f32 %v306, %v320
    %v345 = vadd.f32 %v307, %v320
    %v346 = vadd.f32 %v308, %v320
    %v347 = vadd.f32 %v309, %v320
    %v348 = vadd.f32 %v310, %v320
    %v349 = vadd.f32 %v311, %v320
    %v350 = vadd.f32 %v312, %v320
    %v351 = vadd.f32 %v313, %v320
    %v352 = vadd.f32 %v314, %v320
    %v353 = vadd.f32 %v315, %v320
    %v354 = vpack.c.bf16 %v323, %v322
    %v355 = vpack.c.bf16 %v325, %v324
    %v356 = vpack.c.bf16 %v327, %v326
    %v357 = vpack.c.bf16 %v329, %v328
    %v358 = vpack.c.bf16 %v331, %v330
    %v359 = vpack.c.bf16 %v333, %v332
    %v360 = vpack.c.bf16 %v335, %v334
    %v361 = vpack.c.bf16 %v337, %v336
    %v362 = vpack.c.bf16 %v339, %v338
    %v363 = vpack.c.bf16 %v341, %v340
    %v364 = vpack.c.bf16 %v343, %v342
    %v365 = vpack.c.bf16 %v345, %v344
    %v366 = vpack.c.bf16 %v347, %v346
    %v367 = vpack.c.bf16 %v349, %v348
    %v368 = vpack.c.bf16 %v351, %v350
    %v369 = vpack.c.bf16 %v353, %v352
    %v370 = vld [vmem:[%s3] sm:$0xf]
    %v371 = vld [vmem:[%s3 + $0x4] sm:$0xf]
    %v372 = vld [vmem:[%s4] sm:$0x1]
    %v374 = vlaneseq
    %v375 = vshrl.u32 %v374, 7
    %v376 = vsub.s32 0, %v375
    %v377 = vrot.slane %v372, %v376
    %v381 = vunpack.c.l.b16 %v370
    %v382 = vunpack.c.l.b16 %v371
    %v383 = vpack.c.b16 %v382, %v381
    %v386 = vsel %vm66, %v354, 0
    %v389 = vsel %vm66, %v355, 0
    %v392 = vsel %vm66, %v356, 0
    %v395 = vsel %vm66, %v357, 0
    %v398 = vsel %vm66, %v358, 0
    %v401 = vsel %vm66, %v359, 0
    %v404 = vsel %vm66, %v360, 0
    %v407 = vsel %vm66, %v361, 0
    %v410 = vsel %vm66, %v362, 0
    %v413 = vsel %vm66, %v363, 0
    %v416 = vsel %vm66, %v364, 0
    %v419 = vsel %vm66, %v365, 0
    %v422 = vsel %vm66, %v366, 0
    %v425 = vsel %vm66, %v367, 0
    %v428 = vsel %vm66, %v368, 0
    %v431 = vsel %vm66, %v369, 0
    %433 = vmatprep.subr.bf16.mxu0 0
    %434 = vmatpush1.bf16.msra.mxu0 0
    %435 = vmatprep.subr.bf16.mxu0 0
    %436 = vmatpush1.bf16.msra.mxu0 0
    %437 = vmatprep.subr.bf16.mxu0 0
    %438 = vmatpush1.bf16.msra.mxu0 0
    %439 = vmatprep.subr.bf16.mxu0 0
    %440 = vmatpush1.bf16.msra.mxu0 0
    %441 = vmatprep.subr.bf16.mxu0 0
    %442 = vmatpush1.bf16.msra.mxu0 0
    %443 = vmatprep.subr.bf16.mxu0 0
    %444 = vmatpush1.bf16.msra.mxu0 0
    %445 = vmatprep.subr.bf16.mxu0 0
    %446 = vmatpush1.bf16.msra.mxu0 0
    %447 = vmatprep.subr.bf16.mxu0 0
    %448 = vmatpush1.bf16.msra.mxu0 %v383
    %449 = vmatprep.subr.bf16.mxu0 0
    %450 = vmatpush2.bf16.msra.mxu0 0
    %451 = vmatprep.subr.bf16.mxu0 0
    %452 = vmatpush2.bf16.msra.mxu0 0
    %453 = vmatprep.subr.bf16.mxu0 0
    %454 = vmatpush2.bf16.msra.mxu0 0
    %455 = vmatprep.subr.bf16.mxu0 0
    %456 = vmatpush2.bf16.msra.mxu0 0
    %457 = vmatprep.subr.bf16.mxu0 0
    %458 = vmatpush2.bf16.msra.mxu0 0
    %459 = vmatprep.subr.bf16.mxu0 0
    %460 = vmatpush2.bf16.msra.mxu0 0
    %461 = vmatprep.subr.bf16.mxu0 0
    %462 = vmatpush2.bf16.msra.mxu0 0
    %463 = vmatprep.subr.bf16.mxu0 0
    %464 = vmatpush2.bf16.msra.mxu0 0
    %465 = vmatprep.mubr.bf16.mxu0 0
    %466 = vmatmul.mubr.bf16.gmra.mxu0 %v386
    %v467 = vpop.f32.mrf.mxu0
    %v468 = vadd.f32 %v377, %v467
    %v469 = vpop.f32.mrf.mxu0
    %v470 = vpop.f32.mrf.mxu0
    %v471 = vadd.f32 %v377, %v470
    %v472 = vpop.f32.mrf.mxu0
    %473 = vmatprep.mubr.bf16.mxu0 0
    %474 = vmatmul.mubr.bf16.gmra.mxu0 %v389
    %v475 = vpop.f32.mrf.mxu0
    %v476 = vadd.f32 %v377, %v475
    %v477 = vpop.f32.mrf.mxu0
    %v478 = vpop.f32.mrf.mxu0
    %v479 = vadd.f32 %v377, %v478
    %v480 = vpop.f32.mrf.mxu0
    %481 = vmatprep.mubr.bf16.mxu0 0
    %482 = vmatmul.mubr.bf16.gmra.mxu0 %v392
    %v483 = vpop.f32.mrf.mxu0
    %v484 = vadd.f32 %v377, %v483
    %v485 = vpop.f32.mrf.mxu0
    %v486 = vpop.f32.mrf.mxu0
    %v487 = vadd.f32 %v377, %v486
    %v488 = vpop.f32.mrf.mxu0
    %489 = vmatprep.mubr.bf16.mxu0 0
    %490 = vmatmul.mubr.bf16.gmra.mxu0 %v395
    %v491 = vpop.f32.mrf.mxu0
    %v492 = vadd.f32 %v377, %v491
    %v493 = vpop.f32.mrf.mxu0
    %v494 = vpop.f32.mrf.mxu0
    %v495 = vadd.f32 %v377, %v494
    %v496 = vpop.f32.mrf.mxu0
    %497 = vmatprep.mubr.bf16.mxu0 0
    %498 = vmatmul.mubr.bf16.gmra.mxu0 %v398
    %v499 = vpop.f32.mrf.mxu0
    %v500 = vadd.f32 %v377, %v499
    %v501 = vpop.f32.mrf.mxu0
    %v502 = vpop.f32.mrf.mxu0
    %v503 = vadd.f32 %v377, %v502
    %v504 = vpop.f32.mrf.mxu0
    %505 = vmatprep.mubr.bf16.mxu0 0
    %506 = vmatmul.mubr.bf16.gmra.mxu0 %v401
    %v507 = vpop.f32.mrf.mxu0
    %v508 = vadd.f32 %v377, %v507
    %v509 = vpop.f32.mrf.mxu0
    %v510 = vpop.f32.mrf.mxu0
    %v511 = vadd.f32 %v377, %v510
    %v512 = vpop.f32.mrf.mxu0
    %513 = vmatprep.mubr.bf16.mxu0 0
    %514 = vmatmul.mubr.bf16.gmra.mxu0 %v404
    %v515 = vpop.f32.mrf.mxu0
    %v516 = vadd.f32 %v377, %v515
    %v517 = vpop.f32.mrf.mxu0
    %v518 = vpop.f32.mrf.mxu0
    %v519 = vadd.f32 %v377, %v518
    %v520 = vpop.f32.mrf.mxu0
    %521 = vmatprep.mubr.bf16.mxu0 0
    %522 = vmatmul.mubr.bf16.gmra.mxu0 %v407
    %v523 = vpop.f32.mrf.mxu0
    %v524 = vadd.f32 %v377, %v523
    %v525 = vpop.f32.mrf.mxu0
    %v526 = vpop.f32.mrf.mxu0
    %v527 = vadd.f32 %v377, %v526
    %v528 = vpop.f32.mrf.mxu0
    %529 = vmatprep.mubr.bf16.mxu0 0
    %530 = vmatmul.mubr.bf16.gmra.mxu0 %v410
    %v531 = vpop.f32.mrf.mxu0
    %v532 = vadd.f32 %v377, %v531
    %v533 = vpop.f32.mrf.mxu0
    %v534 = vpop.f32.mrf.mxu0
    %v535 = vadd.f32 %v377, %v534
    %v536 = vpop.f32.mrf.mxu0
    %537 = vmatprep.mubr.bf16.mxu0 0
    %538 = vmatmul.mubr.bf16.gmra.mxu0 %v413
    %v539 = vpop.f32.mrf.mxu0
    %v540 = vadd.f32 %v377, %v539
    %v541 = vpop.f32.mrf.mxu0
    %v542 = vpop.f32.mrf.mxu0
    %v543 = vadd.f32 %v377, %v542
    %v544 = vpop.f32.mrf.mxu0
    %545 = vmatprep.mubr.bf16.mxu0 0
    %546 = vmatmul.mubr.bf16.gmra.mxu0 %v416
    %v547 = vpop.f32.mrf.mxu0
    %v548 = vadd.f32 %v377, %v547
    %v549 = vpop.f32.mrf.mxu0
    %v550 = vpop.f32.mrf.mxu0
    %v551 = vadd.f32 %v377, %v550
    %v552 = vpop.f32.mrf.mxu0
    %553 = vmatprep.mubr.bf16.mxu0 0
    %554 = vmatmul.mubr.bf16.gmra.mxu0 %v419
    %v555 = vpop.f32.mrf.mxu0
    %v556 = vadd.f32 %v377, %v555
    %v557 = vpop.f32.mrf.mxu0
    %v558 = vpop.f32.mrf.mxu0
    %v559 = vadd.f32 %v377, %v558
    %v560 = vpop.f32.mrf.mxu0
    %561 = vmatprep.mubr.bf16.mxu0 0
    %562 = vmatmul.mubr.bf16.gmra.mxu0 %v422
    %v563 = vpop.f32.mrf.mxu0
    %v564 = vadd.f32 %v377, %v563
    %v565 = vpop.f32.mrf.mxu0
    %v566 = vpop.f32.mrf.mxu0
    %v567 = vadd.f32 %v377, %v566
    %v568 = vpop.f32.mrf.mxu0
    %569 = vmatprep.mubr.bf16.mxu0 0
    %570 = vmatmul.mubr.bf16.gmra.mxu0 %v425
    %v571 = vpop.f32.mrf.mxu0
    %v572 = vadd.f32 %v377, %v571
    %v573 = vpop.f32.mrf.mxu0
    %v574 = vpop.f32.mrf.mxu0
    %v575 = vadd.f32 %v377, %v574
    %v576 = vpop.f32.mrf.mxu0
    %577 = vmatprep.mubr.bf16.mxu0 0
    %578 = vmatmul.mubr.bf16.gmra.mxu0 %v428
    %v579 = vpop.f32.mrf.mxu0
    %v580 = vadd.f32 %v377, %v579
    %v581 = vpop.f32.mrf.mxu0
    %v582 = vpop.f32.mrf.mxu0
    %v583 = vadd.f32 %v377, %v582
    %v584 = vpop.f32.mrf.mxu0
    %585 = vmatprep.mubr.bf16.mxu0 0
    %586 = vmatmul.mubr.bf16.gmra.mxu0 %v431
    %v587 = vpop.f32.mrf.mxu0
    %v588 = vadd.f32 %v377, %v587
    %v589 = vpop.f32.mrf.mxu0
    %v590 = vpop.f32.mrf.mxu0
    %v591 = vadd.f32 %v377, %v590
    %v592 = vpop.f32.mrf.mxu0
    %593 = vdwg.mxu0
    %v594 = vmax.f32 %v468, 0.0
    %v595 = vmax.f32 %v471, 0.0
    %v596 = vmax.f32 %v476, 0.0
    %v597 = vmax.f32 %v479, 0.0
    %v598 = vmax.f32 %v484, 0.0
    %v599 = vmax.f32 %v487, 0.0
    %v600 = vmax.f32 %v492, 0.0
    %v601 = vmax.f32 %v495, 0.0
    %v602 = vmax.f32 %v500, 0.0
    %v603 = vmax.f32 %v503, 0.0
    %v604 = vmax.f32 %v508, 0.0
    %v605 = vmax.f32 %v511, 0.0
    %v606 = vmax.f32 %v516, 0.0
    %v607 = vmax.f32 %v519, 0.0
    %v608 = vmax.f32 %v524, 0.0
    %v609 = vmax.f32 %v527, 0.0
    %v610 = vmax.f32 %v532, 0.0
    %v611 = vmax.f32 %v535, 0.0
    %v612 = vmax.f32 %v540, 0.0
    %v613 = vmax.f32 %v543, 0.0
    %v614 = vmax.f32 %v548, 0.0
    %v615 = vmax.f32 %v551, 0.0
    %v616 = vmax.f32 %v556, 0.0
    %v617 = vmax.f32 %v559, 0.0
    %v618 = vmax.f32 %v564, 0.0
    %v619 = vmax.f32 %v567, 0.0
    %v620 = vmax.f32 %v572, 0.0
    %v621 = vmax.f32 %v575, 0.0
    %v622 = vmax.f32 %v580, 0.0
    %v623 = vmax.f32 %v583, 0.0
    %v624 = vmax.f32 %v588, 0.0
    %v625 = vmax.f32 %v591, 0.0
    %v626 = vpack.c.bf16 %v595, %v594
    %v627 = vpack.c.bf16 %v597, %v596
    %v628 = vpack.c.bf16 %v599, %v598
    %v629 = vpack.c.bf16 %v601, %v600
    %v630 = vpack.c.bf16 %v603, %v602
    %v631 = vpack.c.bf16 %v605, %v604
    %v632 = vpack.c.bf16 %v607, %v606
    %v633 = vpack.c.bf16 %v609, %v608
    %v634 = vpack.c.bf16 %v611, %v610
    %v635 = vpack.c.bf16 %v613, %v612
    %v636 = vpack.c.bf16 %v615, %v614
    %v637 = vpack.c.bf16 %v617, %v616
    %v638 = vpack.c.bf16 %v619, %v618
    %v639 = vpack.c.bf16 %v621, %v620
    %v640 = vpack.c.bf16 %v623, %v622
    %v641 = vpack.c.bf16 %v625, %v624
    %v642 = vld [vmem:[%s5] sm:$0xf]
    %v643 = vld [vmem:[%s5 + $0x4] sm:$0xf]
    %v644 = vld [vmem:[%s5 + $0x8] sm:$0xf]
    %v645 = vld [vmem:[%s5 + $0xc] sm:$0xf]
    %v646 = vld [vmem:[%s5 + $0x10] sm:$0xf]
    %v647 = vld [vmem:[%s5 + $0x14] sm:$0xf]
    %v648 = vld [vmem:[%s5 + $0x18] sm:$0xf]
    %v649 = vld [vmem:[%s5 + $0x1c] sm:$0xf]
    %v650 = vld [vmem:[%s5 + $0x20] sm:$0xf]
    %v651 = vld [vmem:[%s5 + $0x24] sm:$0xf]
    %v652 = vld [vmem:[%s5 + $0x28] sm:$0xf]
    %v653 = vld [vmem:[%s5 + $0x2c] sm:$0xf]
    %v654 = vld [vmem:[%s5 + $0x30] sm:$0xf]
    %v655 = vld [vmem:[%s5 + $0x34] sm:$0xf]
    %v656 = vld [vmem:[%s5 + $0x38] sm:$0xf]
    %v657 = vld [vmem:[%s5 + $0x3c] sm:$0xf]
    %v658 = vld [vmem:[%s6] sm:$0x1]
    %v660 = vlaneseq
    %v661 = vshrl.u32 %v660, 7
    %v662 = vsub.s32 0, %v661
    %v663 = vrot.slane %v658, %v662
    %v681 = vunpack.c.l.b16 %v642
    %v682 = vunpack.c.l.b16 %v643
    %v683 = vunpack.c.l.b16 %v644
    %v684 = vunpack.c.l.b16 %v645
    %v685 = vunpack.c.l.b16 %v646
    %v686 = vunpack.c.l.b16 %v647
    %v687 = vunpack.c.l.b16 %v648
    %v688 = vunpack.c.l.b16 %v649
    %v689 = vunpack.c.l.b16 %v650
    %v690 = vunpack.c.l.b16 %v651
    %v691 = vunpack.c.l.b16 %v652
    %v692 = vunpack.c.l.b16 %v653
    %v693 = vunpack.c.l.b16 %v654
    %v694 = vunpack.c.l.b16 %v655
    %v695 = vunpack.c.l.b16 %v656
    %v696 = vunpack.c.l.b16 %v657
    %v697 = vpack.c.b16 %v682, %v681
    %v698 = vpack.c.b16 %v684, %v683
    %v699 = vpack.c.b16 %v686, %v685
    %v700 = vpack.c.b16 %v688, %v687
    %v701 = vpack.c.b16 %v690, %v689
    %v702 = vpack.c.b16 %v692, %v691
    %v703 = vpack.c.b16 %v694, %v693
    %v704 = vpack.c.b16 %v696, %v695
    %713 = vmatprep.subr.bf16.mxu0 0
    %714 = vmatpush1.bf16.msra.mxu0 %v704
    %715 = vmatprep.subr.bf16.mxu0 0
    %716 = vmatpush1.bf16.msra.mxu0 %v703
    %717 = vmatprep.subr.bf16.mxu0 0
    %718 = vmatpush1.bf16.msra.mxu0 %v702
    %719 = vmatprep.subr.bf16.mxu0 0
    %720 = vmatpush1.bf16.msra.mxu0 %v701
    %721 = vmatprep.subr.bf16.mxu0 0
    %722 = vmatpush1.bf16.msra.mxu0 %v700
    %723 = vmatprep.subr.bf16.mxu0 0
    %724 = vmatpush1.bf16.msra.mxu0 %v699
    %725 = vmatprep.subr.bf16.mxu0 0
    %726 = vmatpush1.bf16.msra.mxu0 %v698
    %727 = vmatprep.subr.bf16.mxu0 0
    %728 = vmatpush1.bf16.msra.mxu0 %v697
    %729 = vmatprep.subr.bf16.mxu0 0
    %730 = vmatpush2.bf16.msra.mxu0 0
    %731 = vmatprep.subr.bf16.mxu0 0
    %732 = vmatpush2.bf16.msra.mxu0 0
    %733 = vmatprep.subr.bf16.mxu0 0
    %734 = vmatpush2.bf16.msra.mxu0 0
    %735 = vmatprep.subr.bf16.mxu0 0
    %736 = vmatpush2.bf16.msra.mxu0 0
    %737 = vmatprep.subr.bf16.mxu0 0
    %738 = vmatpush2.bf16.msra.mxu0 0
    %739 = vmatprep.subr.bf16.mxu0 0
    %740 = vmatpush2.bf16.msra.mxu0 0
    %741 = vmatprep.subr.bf16.mxu0 0
    %742 = vmatpush2.bf16.msra.mxu0 0
    %743 = vmatprep.subr.bf16.mxu0 0
    %744 = vmatpush2.bf16.msra.mxu0 0
    %745 = vmatprep.mubr.bf16.mxu0 0
    %746 = vmatmul.mubr.bf16.gmra.mxu0 %v626
    %v747 = vpop.f32.mrf.mxu0
    %v748 = vadd.f32 %v663, %v747
    %v749 = vpop.f32.mrf.mxu0
    %v750 = vpop.f32.mrf.mxu0
    %v751 = vadd.f32 %v663, %v750
    %v752 = vpop.f32.mrf.mxu0
    %753 = vmatprep.mubr.bf16.mxu0 0
    %754 = vmatmul.mubr.bf16.gmra.mxu0 %v627
    %v755 = vpop.f32.mrf.mxu0
    %v756 = vadd.f32 %v663, %v755
    %v757 = vpop.f32.mrf.mxu0
    %v758 = vpop.f32.mrf.mxu0
    %v759 = vadd.f32 %v663, %v758
    %v760 = vpop.f32.mrf.mxu0
    %761 = vmatprep.mubr.bf16.mxu0 0
    %762 = vmatmul.mubr.bf16.gmra.mxu0 %v628
    %v763 = vpop.f32.mrf.mxu0
    %v764 = vadd.f32 %v663, %v763
    %v765 = vpop.f32.mrf.mxu0
    %v766 = vpop.f32.mrf.mxu0
    %v767 = vadd.f32 %v663, %v766
    %v768 = vpop.f32.mrf.mxu0
    %769 = vmatprep.mubr.bf16.mxu0 0
    %770 = vmatmul.mubr.bf16.gmra.mxu0 %v629
    %v771 = vpop.f32.mrf.mxu0
    %v772 = vadd.f32 %v663, %v771
    %v773 = vpop.f32.mrf.mxu0
    %v774 = vpop.f32.mrf.mxu0
    %v775 = vadd.f32 %v663, %v774
    %v776 = vpop.f32.mrf.mxu0
    %777 = vmatprep.mubr.bf16.mxu0 0
    %778 = vmatmul.mubr.bf16.gmra.mxu0 %v630
    %v779 = vpop.f32.mrf.mxu0
    %v780 = vadd.f32 %v663, %v779
    %v781 = vpop.f32.mrf.mxu0
    %v782 = vpop.f32.mrf.mxu0
    %v783 = vadd.f32 %v663, %v782
    %v784 = vpop.f32.mrf.mxu0
    %785 = vmatprep.mubr.bf16.mxu0 0
    %786 = vmatmul.mubr.bf16.gmra.mxu0 %v631
    %v787 = vpop.f32.mrf.mxu0
    %v788 = vadd.f32 %v663, %v787
    %v789 = vpop.f32.mrf.mxu0
    %v790 = vpop.f32.mrf.mxu0
    %v791 = vadd.f32 %v663, %v790
    %v792 = vpop.f32.mrf.mxu0
    %793 = vmatprep.mubr.bf16.mxu0 0
    %794 = vmatmul.mubr.bf16.gmra.mxu0 %v632
    %v795 = vpop.f32.mrf.mxu0
    %v796 = vadd.f32 %v663, %v795
    %v797 = vpop.f32.mrf.mxu0
    %v798 = vpop.f32.mrf.mxu0
    %v799 = vadd.f32 %v663, %v798
    %v800 = vpop.f32.mrf.mxu0
    %801 = vmatprep.mubr.bf16.mxu0 0
    %802 = vmatmul.mubr.bf16.gmra.mxu0 %v633
    %v803 = vpop.f32.mrf.mxu0
    %v804 = vadd.f32 %v663, %v803
    %v805 = vpop.f32.mrf.mxu0
    %v806 = vpop.f32.mrf.mxu0
    %v807 = vadd.f32 %v663, %v806
    %v808 = vpop.f32.mrf.mxu0
    %809 = vmatprep.mubr.bf16.mxu0 0
    %810 = vmatmul.mubr.bf16.gmra.mxu0 %v634
    %v811 = vpop.f32.mrf.mxu0
    %v812 = vadd.f32 %v663, %v811
    %v813 = vpop.f32.mrf.mxu0
    %v814 = vpop.f32.mrf.mxu0
    %v815 = vadd.f32 %v663, %v814
    %v816 = vpop.f32.mrf.mxu0
    %817 = vmatprep.mubr.bf16.mxu0 0
    %818 = vmatmul.mubr.bf16.gmra.mxu0 %v635
    %v819 = vpop.f32.mrf.mxu0
    %v820 = vadd.f32 %v663, %v819
    %v821 = vpop.f32.mrf.mxu0
    %v822 = vpop.f32.mrf.mxu0
    %v823 = vadd.f32 %v663, %v822
    %v824 = vpop.f32.mrf.mxu0
    %825 = vmatprep.mubr.bf16.mxu0 0
    %826 = vmatmul.mubr.bf16.gmra.mxu0 %v636
    %v827 = vpop.f32.mrf.mxu0
    %v828 = vadd.f32 %v663, %v827
    %v829 = vpop.f32.mrf.mxu0
    %v830 = vpop.f32.mrf.mxu0
    %v831 = vadd.f32 %v663, %v830
    %v832 = vpop.f32.mrf.mxu0
    %833 = vmatprep.mubr.bf16.mxu0 0
    %834 = vmatmul.mubr.bf16.gmra.mxu0 %v637
    %v835 = vpop.f32.mrf.mxu0
    %v836 = vadd.f32 %v663, %v835
    %v837 = vpop.f32.mrf.mxu0
    %v838 = vpop.f32.mrf.mxu0
    %v839 = vadd.f32 %v663, %v838
    %v840 = vpop.f32.mrf.mxu0
    %841 = vmatprep.mubr.bf16.mxu0 0
    %842 = vmatmul.mubr.bf16.gmra.mxu0 %v638
    %v843 = vpop.f32.mrf.mxu0
    %v844 = vadd.f32 %v663, %v843
    %v845 = vpop.f32.mrf.mxu0
    %v846 = vpop.f32.mrf.mxu0
    %v847 = vadd.f32 %v663, %v846
    %v848 = vpop.f32.mrf.mxu0
    %849 = vmatprep.mubr.bf16.mxu0 0
    %850 = vmatmul.mubr.bf16.gmra.mxu0 %v639
    %v851 = vpop.f32.mrf.mxu0
    %v852 = vadd.f32 %v663, %v851
    %v853 = vpop.f32.mrf.mxu0
    %v854 = vpop.f32.mrf.mxu0
    %v855 = vadd.f32 %v663, %v854
    %v856 = vpop.f32.mrf.mxu0
    %857 = vmatprep.mubr.bf16.mxu0 0
    %858 = vmatmul.mubr.bf16.gmra.mxu0 %v640
    %v859 = vpop.f32.mrf.mxu0
    %v860 = vadd.f32 %v663, %v859
    %v861 = vpop.f32.mrf.mxu0
    %v862 = vpop.f32.mrf.mxu0
    %v863 = vadd.f32 %v663, %v862
    %v864 = vpop.f32.mrf.mxu0
    %865 = vmatprep.mubr.bf16.mxu0 0
    %866 = vmatmul.mubr.bf16.gmra.mxu0 %v641
    %v867 = vpop.f32.mrf.mxu0
    %v868 = vadd.f32 %v663, %v867
    %v869 = vpop.f32.mrf.mxu0
    %v870 = vpop.f32.mrf.mxu0
    %v871 = vadd.f32 %v663, %v870
    %v872 = vpop.f32.mrf.mxu0
    %873 = vdwg.mxu0
    %v874 = vmax.f32 %v748, 0.0
    %v875 = vmax.f32 %v751, 0.0
    %v876 = vmax.f32 %v756, 0.0
    %v877 = vmax.f32 %v759, 0.0
    %v878 = vmax.f32 %v764, 0.0
    %v879 = vmax.f32 %v767, 0.0
    %v880 = vmax.f32 %v772, 0.0
    %v881 = vmax.f32 %v775, 0.0
    %v882 = vmax.f32 %v780, 0.0
    %v883 = vmax.f32 %v783, 0.0
    %v884 = vmax.f32 %v788, 0.0
    %v885 = vmax.f32 %v791, 0.0
    %v886 = vmax.f32 %v796, 0.0
    %v887 = vmax.f32 %v799, 0.0
    %v888 = vmax.f32 %v804, 0.0
    %v889 = vmax.f32 %v807, 0.0
    %v890 = vmax.f32 %v812, 0.0
    %v891 = vmax.f32 %v815, 0.0
    %v892 = vmax.f32 %v820, 0.0
    %v893 = vmax.f32 %v823, 0.0
    %v894 = vmax.f32 %v828, 0.0
    %v895 = vmax.f32 %v831, 0.0
    %v896 = vmax.f32 %v836, 0.0
    %v897 = vmax.f32 %v839, 0.0
    %v898 = vmax.f32 %v844, 0.0
    %v899 = vmax.f32 %v847, 0.0
    %v900 = vmax.f32 %v852, 0.0
    %v901 = vmax.f32 %v855, 0.0
    %v902 = vmax.f32 %v860, 0.0
    %v903 = vmax.f32 %v863, 0.0
    %v904 = vmax.f32 %v868, 0.0
    %v905 = vmax.f32 %v871, 0.0
    %v906 = vpack.c.bf16 %v875, %v874
    %v907 = vpack.c.bf16 %v877, %v876
    %v908 = vpack.c.bf16 %v879, %v878
    %v909 = vpack.c.bf16 %v881, %v880
    %v910 = vpack.c.bf16 %v883, %v882
    %v911 = vpack.c.bf16 %v885, %v884
    %v912 = vpack.c.bf16 %v887, %v886
    %v913 = vpack.c.bf16 %v889, %v888
    %v914 = vpack.c.bf16 %v891, %v890
    %v915 = vpack.c.bf16 %v893, %v892
    %v916 = vpack.c.bf16 %v895, %v894
    %v917 = vpack.c.bf16 %v897, %v896
    %v918 = vpack.c.bf16 %v899, %v898
    %v919 = vpack.c.bf16 %v901, %v900
    %v920 = vpack.c.bf16 %v903, %v902
    %v921 = vpack.c.bf16 %v905, %v904
    %v922 = vld [vmem:[%s7] sm:$0xf]
    %v923 = vld [vmem:[%s7 + $0x4] sm:$0xf]
    %v924 = vld [vmem:[%s7 + $0x8] sm:$0xf]
    %v925 = vld [vmem:[%s7 + $0xc] sm:$0xf]
    %v926 = vld [vmem:[%s7 + $0x10] sm:$0xf]
    %v927 = vld [vmem:[%s7 + $0x14] sm:$0xf]
    %v928 = vld [vmem:[%s7 + $0x18] sm:$0xf]
    %v929 = vld [vmem:[%s7 + $0x1c] sm:$0xf]
    %v930 = vld [vmem:[%s7 + $0x20] sm:$0xf]
    %v931 = vld [vmem:[%s7 + $0x24] sm:$0xf]
    %v932 = vld [vmem:[%s7 + $0x28] sm:$0xf]
    %v933 = vld [vmem:[%s7 + $0x2c] sm:$0xf]
    %v934 = vld [vmem:[%s7 + $0x30] sm:$0xf]
    %v935 = vld [vmem:[%s7 + $0x34] sm:$0xf]
    %v936 = vld [vmem:[%s7 + $0x38] sm:$0xf]
    %v937 = vld [vmem:[%s7 + $0x3c] sm:$0xf]
    %v938 = vld [vmem:[%s8] sm:$0x1]
    %v940 = vlaneseq
    %v941 = vshrl.u32 %v940, 7
    %v942 = vsub.s32 0, %v941
    %v943 = vrot.slane %v938, %v942
    %v961 = vunpack.c.l.b16 %v922
    %v962 = vunpack.c.l.b16 %v923
    %v963 = vunpack.c.l.b16 %v924
    %v964 = vunpack.c.l.b16 %v925
    %v965 = vunpack.c.l.b16 %v926
    %v966 = vunpack.c.l.b16 %v927
    %v967 = vunpack.c.l.b16 %v928
    %v968 = vunpack.c.l.b16 %v929
    %v969 = vunpack.c.l.b16 %v930
    %v970 = vunpack.c.l.b16 %v931
    %v971 = vunpack.c.l.b16 %v932
    %v972 = vunpack.c.l.b16 %v933
    %v973 = vunpack.c.l.b16 %v934
    %v974 = vunpack.c.l.b16 %v935
    %v975 = vunpack.c.l.b16 %v936
    %v976 = vunpack.c.l.b16 %v937
    %v977 = vpack.c.b16 %v962, %v961
    %v978 = vpack.c.b16 %v964, %v963
    %v979 = vpack.c.b16 %v966, %v965
    %v980 = vpack.c.b16 %v968, %v967
    %v981 = vpack.c.b16 %v970, %v969
    %v982 = vpack.c.b16 %v972, %v971
    %v983 = vpack.c.b16 %v974, %v973
    %v984 = vpack.c.b16 %v976, %v975
    %993 = vmatprep.subr.bf16.mxu0 0
    %994 = vmatpush1.bf16.msra.mxu0 %v984
    %995 = vmatprep.subr.bf16.mxu0 0
    %996 = vmatpush1.bf16.msra.mxu0 %v983
    %997 = vmatprep.subr.bf16.mxu0 0
    %998 = vmatpush1.bf16.msra.mxu0 %v982
    %999 = vmatprep.subr.bf16.mxu0 0
    %1000 = vmatpush1.bf16.msra.mxu0 %v981
    %1001 = vmatprep.subr.bf16.mxu0 0
    %1002 = vmatpush1.bf16.msra.mxu0 %v980
    %1003 = vmatprep.subr.bf16.mxu0 0
    %1004 = vmatpush1.bf16.msra.mxu0 %v979
    %1005 = vmatprep.subr.bf16.mxu0 0
    %1006 = vmatpush1.bf16.msra.mxu0 %v978
    %1007 = vmatprep.subr.bf16.mxu0 0
    %1008 = vmatpush1.bf16.msra.mxu0 %v977
    %1009 = vmatprep.subr.bf16.mxu0 0
    %1010 = vmatpush2.bf16.msra.mxu0 0
    %1011 = vmatprep.subr.bf16.mxu0 0
    %1012 = vmatpush2.bf16.msra.mxu0 0
    %1013 = vmatprep.subr.bf16.mxu0 0
    %1014 = vmatpush2.bf16.msra.mxu0 0
    %1015 = vmatprep.subr.bf16.mxu0 0
    %1016 = vmatpush2.bf16.msra.mxu0 0
    %1017 = vmatprep.subr.bf16.mxu0 0
    %1018 = vmatpush2.bf16.msra.mxu0 0
    %1019 = vmatprep.subr.bf16.mxu0 0
    %1020 = vmatpush2.bf16.msra.mxu0 0
    %1021 = vmatprep.subr.bf16.mxu0 0
    %1022 = vmatpush2.bf16.msra.mxu0 0
    %1023 = vmatprep.subr.bf16.mxu0 0
    %1024 = vmatpush2.bf16.msra.mxu0 0
    %1025 = vmatprep.mubr.bf16.mxu0 0
    %1026 = vmatmul.mubr.bf16.gmra.mxu0 %v906
    %v1027 = vpop.f32.mrf.mxu0
    %v1028 = vadd.f32 %v943, %v1027
    %v1029 = vpop.f32.mrf.mxu0
    %v1030 = vpop.f32.mrf.mxu0
    %v1031 = vadd.f32 %v943, %v1030
    %v1032 = vpop.f32.mrf.mxu0
    %1033 = vmatprep.mubr.bf16.mxu0 0
    %1034 = vmatmul.mubr.bf16.gmra.mxu0 %v907
    %v1035 = vpop.f32.mrf.mxu0
    %v1036 = vadd.f32 %v943, %v1035
    %v1037 = vpop.f32.mrf.mxu0
    %v1038 = vpop.f32.mrf.mxu0
    %v1039 = vadd.f32 %v943, %v1038
    %v1040 = vpop.f32.mrf.mxu0
    %1041 = vmatprep.mubr.bf16.mxu0 0
    %1042 = vmatmul.mubr.bf16.gmra.mxu0 %v908
    %v1043 = vpop.f32.mrf.mxu0
    %v1044 = vadd.f32 %v943, %v1043
    %v1045 = vpop.f32.mrf.mxu0
    %v1046 = vpop.f32.mrf.mxu0
    %v1047 = vadd.f32 %v943, %v1046
    %v1048 = vpop.f32.mrf.mxu0
    %1049 = vmatprep.mubr.bf16.mxu0 0
    %1050 = vmatmul.mubr.bf16.gmra.mxu0 %v909
    %v1051 = vpop.f32.mrf.mxu0
    %v1052 = vadd.f32 %v943, %v1051
    %v1053 = vpop.f32.mrf.mxu0
    %v1054 = vpop.f32.mrf.mxu0
    %v1055 = vadd.f32 %v943, %v1054
    %v1056 = vpop.f32.mrf.mxu0
    %1057 = vmatprep.mubr.bf16.mxu0 0
    %1058 = vmatmul.mubr.bf16.gmra.mxu0 %v910
    %v1059 = vpop.f32.mrf.mxu0
    %v1060 = vadd.f32 %v943, %v1059
    %v1061 = vpop.f32.mrf.mxu0
    %v1062 = vpop.f32.mrf.mxu0
    %v1063 = vadd.f32 %v943, %v1062
    %v1064 = vpop.f32.mrf.mxu0
    %1065 = vmatprep.mubr.bf16.mxu0 0
    %1066 = vmatmul.mubr.bf16.gmra.mxu0 %v911
    %v1067 = vpop.f32.mrf.mxu0
    %v1068 = vadd.f32 %v943, %v1067
    %v1069 = vpop.f32.mrf.mxu0
    %v1070 = vpop.f32.mrf.mxu0
    %v1071 = vadd.f32 %v943, %v1070
    %v1072 = vpop.f32.mrf.mxu0
    %1073 = vmatprep.mubr.bf16.mxu0 0
    %1074 = vmatmul.mubr.bf16.gmra.mxu0 %v912
    %v1075 = vpop.f32.mrf.mxu0
    %v1076 = vadd.f32 %v943, %v1075
    %v1077 = vpop.f32.mrf.mxu0
    %v1078 = vpop.f32.mrf.mxu0
    %v1079 = vadd.f32 %v943, %v1078
    %v1080 = vpop.f32.mrf.mxu0
    %1081 = vmatprep.mubr.bf16.mxu0 0
    %1082 = vmatmul.mubr.bf16.gmra.mxu0 %v913
    %v1083 = vpop.f32.mrf.mxu0
    %v1084 = vadd.f32 %v943, %v1083
    %v1085 = vpop.f32.mrf.mxu0
    %v1086 = vpop.f32.mrf.mxu0
    %v1087 = vadd.f32 %v943, %v1086
    %v1088 = vpop.f32.mrf.mxu0
    %1089 = vmatprep.mubr.bf16.mxu0 0
    %1090 = vmatmul.mubr.bf16.gmra.mxu0 %v914
    %v1091 = vpop.f32.mrf.mxu0
    %v1092 = vadd.f32 %v943, %v1091
    %v1093 = vpop.f32.mrf.mxu0
    %v1094 = vpop.f32.mrf.mxu0
    %v1095 = vadd.f32 %v943, %v1094
    %v1096 = vpop.f32.mrf.mxu0
    %1097 = vmatprep.mubr.bf16.mxu0 0
    %1098 = vmatmul.mubr.bf16.gmra.mxu0 %v915
    %v1099 = vpop.f32.mrf.mxu0
    %v1100 = vadd.f32 %v943, %v1099
    %v1101 = vpop.f32.mrf.mxu0
    %v1102 = vpop.f32.mrf.mxu0
    %v1103 = vadd.f32 %v943, %v1102
    %v1104 = vpop.f32.mrf.mxu0
    %1105 = vmatprep.mubr.bf16.mxu0 0
    %1106 = vmatmul.mubr.bf16.gmra.mxu0 %v916
    %v1107 = vpop.f32.mrf.mxu0
    %v1108 = vadd.f32 %v943, %v1107
    %v1109 = vpop.f32.mrf.mxu0
    %v1110 = vpop.f32.mrf.mxu0
    %v1111 = vadd.f32 %v943, %v1110
    %v1112 = vpop.f32.mrf.mxu0
    %1113 = vmatprep.mubr.bf16.mxu0 0
    %1114 = vmatmul.mubr.bf16.gmra.mxu0 %v917
    %v1115 = vpop.f32.mrf.mxu0
    %v1116 = vadd.f32 %v943, %v1115
    %v1117 = vpop.f32.mrf.mxu0
    %v1118 = vpop.f32.mrf.mxu0
    %v1119 = vadd.f32 %v943, %v1118
    %v1120 = vpop.f32.mrf.mxu0
    %1121 = vmatprep.mubr.bf16.mxu0 0
    %1122 = vmatmul.mubr.bf16.gmra.mxu0 %v918
    %v1123 = vpop.f32.mrf.mxu0
    %v1124 = vadd.f32 %v943, %v1123
    %v1125 = vpop.f32.mrf.mxu0
    %v1126 = vpop.f32.mrf.mxu0
    %v1127 = vadd.f32 %v943, %v1126
    %v1128 = vpop.f32.mrf.mxu0
    %1129 = vmatprep.mubr.bf16.mxu0 0
    %1130 = vmatmul.mubr.bf16.gmra.mxu0 %v919
    %v1131 = vpop.f32.mrf.mxu0
    %v1132 = vadd.f32 %v943, %v1131
    %v1133 = vpop.f32.mrf.mxu0
    %v1134 = vpop.f32.mrf.mxu0
    %v1135 = vadd.f32 %v943, %v1134
    %v1136 = vpop.f32.mrf.mxu0
    %1137 = vmatprep.mubr.bf16.mxu0 0
    %1138 = vmatmul.mubr.bf16.gmra.mxu0 %v920
    %v1139 = vpop.f32.mrf.mxu0
    %v1140 = vadd.f32 %v943, %v1139
    %v1141 = vpop.f32.mrf.mxu0
    %v1142 = vpop.f32.mrf.mxu0
    %v1143 = vadd.f32 %v943, %v1142
    %v1144 = vpop.f32.mrf.mxu0
    %1145 = vmatprep.mubr.bf16.mxu0 0
    %1146 = vmatmul.mubr.bf16.gmra.mxu0 %v921
    %v1147 = vpop.f32.mrf.mxu0
    %v1148 = vadd.f32 %v943, %v1147
    %v1149 = vpop.f32.mrf.mxu0
    %v1150 = vpop.f32.mrf.mxu0
    %v1151 = vadd.f32 %v943, %v1150
    %v1152 = vpop.f32.mrf.mxu0
    %1153 = vdwg.mxu0
    %v1154 = vmax.f32 %v1028, 0.0
    %v1155 = vmax.f32 %v1031, 0.0
    %v1156 = vmax.f32 %v1036, 0.0
    %v1157 = vmax.f32 %v1039, 0.0
    %v1158 = vmax.f32 %v1044, 0.0
    %v1159 = vmax.f32 %v1047, 0.0
    %v1160 = vmax.f32 %v1052, 0.0
    %v1161 = vmax.f32 %v1055, 0.0
    %v1162 = vmax.f32 %v1060, 0.0
    %v1163 = vmax.f32 %v1063, 0.0
    %v1164 = vmax.f32 %v1068, 0.0
    %v1165 = vmax.f32 %v1071, 0.0
    %v1166 = vmax.f32 %v1076, 0.0
    %v1167 = vmax.f32 %v1079, 0.0
    %v1168 = vmax.f32 %v1084, 0.0
    %v1169 = vmax.f32 %v1087, 0.0
    %v1170 = vmax.f32 %v1092, 0.0
    %v1171 = vmax.f32 %v1095, 0.0
    %v1172 = vmax.f32 %v1100, 0.0
    %v1173 = vmax.f32 %v1103, 0.0
    %v1174 = vmax.f32 %v1108, 0.0
    %v1175 = vmax.f32 %v1111, 0.0
    %v1176 = vmax.f32 %v1116, 0.0
    %v1177 = vmax.f32 %v1119, 0.0
    %v1178 = vmax.f32 %v1124, 0.0
    %v1179 = vmax.f32 %v1127, 0.0
    %v1180 = vmax.f32 %v1132, 0.0
    %v1181 = vmax.f32 %v1135, 0.0
    %v1182 = vmax.f32 %v1140, 0.0
    %v1183 = vmax.f32 %v1143, 0.0
    %v1184 = vmax.f32 %v1148, 0.0
    %v1185 = vmax.f32 %v1151, 0.0
    %1186 = vst [vmem:[#allocation2] sm:$0xff] %v1154
    %1187 = vst [vmem:[#allocation2 + $0x8] sm:$0xff] %v1155
    %1188 = vst [vmem:[#allocation2 + $0x10] sm:$0xff] %v1156
    %1189 = vst [vmem:[#allocation2 + $0x18] sm:$0xff] %v1157
    %1190 = vst [vmem:[#allocation2 + $0x20] sm:$0xff] %v1158
    %1191 = vst [vmem:[#allocation2 + $0x28] sm:$0xff] %v1159
    %1192 = vst [vmem:[#allocation2 + $0x30] sm:$0xff] %v1160
    %1193 = vst [vmem:[#allocation2 + $0x38] sm:$0xff] %v1161
    %1194 = vst [vmem:[#allocation2 + $0x40] sm:$0xff] %v1162
    %1195 = vst [vmem:[#allocation2 + $0x48] sm:$0xff] %v1163
    %1196 = vst [vmem:[#allocation2 + $0x50] sm:$0xff] %v1164
    %1197 = vst [vmem:[#allocation2 + $0x58] sm:$0xff] %v1165
    %1198 = vst [vmem:[#allocation2 + $0x60] sm:$0xff] %v1166
    %1199 = vst [vmem:[#allocation2 + $0x68] sm:$0xff] %v1167
    %1200 = vst [vmem:[#allocation2 + $0x70] sm:$0xff] %v1168
    %1201 = vst [vmem:[#allocation2 + $0x78] sm:$0xff] %v1169
    %1202 = vst [vmem:[#allocation2 + $0x80] sm:$0xff] %v1170
    %1203 = vst [vmem:[#allocation2 + $0x88] sm:$0xff] %v1171
    %1204 = vst [vmem:[#allocation2 + $0x90] sm:$0xff] %v1172
    %1205 = vst [vmem:[#allocation2 + $0x98] sm:$0xff] %v1173
    %1206 = vst [vmem:[#allocation2 + $0xa0] sm:$0xff] %v1174
    %1207 = vst [vmem:[#allocation2 + $0xa8] sm:$0xff] %v1175
    %1208 = vst [vmem:[#allocation2 + $0xb0] sm:$0xff] %v1176
    %1209 = vst [vmem:[#allocation2 + $0xb8] sm:$0xff] %v1177
    %1210 = vst [vmem:[#allocation2 + $0xc0] sm:$0xff] %v1178
    %1211 = vst [vmem:[#allocation2 + $0xc8] sm:$0xff] %v1179
    %1212 = vst [vmem:[#allocation2 + $0xd0] sm:$0xff] %v1180
    %1213 = vst [vmem:[#allocation2 + $0xd8] sm:$0xff] %v1181
    %1214 = vst [vmem:[#allocation2 + $0xe0] sm:$0xff] %v1182
    %1215 = vst [vmem:[#allocation2 + $0xe8] sm:$0xff] %v1183
    %1216 = vst [vmem:[#allocation2 + $0xf0] sm:$0xff] %v1184
    %1217 = vst [vmem:[#allocation2 + $0xf8] sm:$0xff] %v1185
    // Predicated region
    $region38: #{tpu_custom_call.1} parent=1 // pred_check
      _
    $region39: #{tpu_custom_call.1} parent=1 // pred_check_branch
      %1219 = sbr.rel (0) target = $region41
    $region40: #{tpu_custom_call.1} parent=1 // pred_region
      %s1221 = ssub.s32 4096, 4096
      %1222 = vsyncadd [#allocation3], %s1221
      %s1223 = sshll.u32 [#allocation2], 4
      %s1224 = int_to_ptr.vmem [resolvable:$true] %s1223
      %1229 = dma.vmem_to_hbm [thread:$0]  %s1224, 4096, %s9, [#allocation3], 128, 128, 8
    $region41: #{tpu_custom_call.1} parent=1 // pred_fallthru
      _
    // Predicated region
    $region42: #{tpu_custom_call.1} parent=1 // pred_check
      _
    $region43: #{tpu_custom_call.1} parent=1 // pred_check_branch
      %1231 = sbr.rel (0) target = $region45
    $region44: #{tpu_custom_call.1} parent=1 // pred_region
      %1232 = dma.done [#allocation3], 4096
    $region45: #{tpu_custom_call.1} parent=1 // pred_fallthru
      _
    %1233 = vsyncpa [#allocation3], 1

</llo_original>
